<compile_context>
chip_gen: v7x
topology: tpu7x:2x2x1
jax: 0.10.0
libtpu: 0.0.40
codegen_flags: <defaults>
</compile_context>

<pallas_src>
import functools

import jax
import jax.numpy as jnp
from jax.experimental import pallas as pl
from jax.experimental.pallas import tpu as pltpu


def _round_up(x, m):
    return ((x + m - 1) // m) * m


def _cdiv(a, b):
    return -(-a // b)


def _actor_critic_kernel(x_ref, w_ref, b_ref, out_ref, *, in_pad, action_space,
                         out_lanes):
    """x_ref: [tB, in_pad], w_ref: [in_pad+256, 128], b_ref: [8, 128],
    out_ref: [tB, out_lanes] (lanes 0..A-1 = actor probs, lane A = value)."""
    x = x_ref[...]                                   # f32
    b = b_ref[...]                                   # [8, 128]

    # Static, sublane-aligned views into the fused weight slab.
    w1 = w_ref[0:in_pad, :]                          # [in_pad, 128]
    w2 = w_ref[in_pad:in_pad + 128, :]               # [128, 128] block-diag
    w3 = w_ref[in_pad + 128:in_pad + 256, :]         # [128, 128] block-diag

    # Layer 1: actor hidden in lanes 0..63, critic hidden in lanes 64..127.
    h1 = jnp.tanh(jnp.dot(x, w1, preferred_element_type=jnp.float32) + b[0:1, :])
    # Layer 2: actor hidden2 lanes 0..31, critic hidden2 lanes 32..63, rest 0.
    h2 = jnp.tanh(jnp.dot(h1, w2, preferred_element_type=jnp.float32) + b[1:2, :])
    # Layer 3: actor logits lanes 0..A-1, critic value lane A, rest 0.
    z = jnp.dot(h2, w3, preferred_element_type=jnp.float32) + b[2:3, :]

    # Masked softmax over the actor lanes only (numerically stabilized).
    lane = jax.lax.broadcasted_iota(jnp.int32, z.shape, dimension=1)
    is_actor = lane < action_space
    logits = jnp.where(is_actor, z, -jnp.inf)
    m = jnp.max(logits, axis=-1, keepdims=True)
    e = jnp.exp(logits - m)                          # masked lanes -> exp(-inf) = 0
    denom = jnp.sum(e, axis=-1, keepdims=True)
    probs = e * pl.reciprocal(denom, approx=False)   # exact: keep 1e-5 tolerance

    # Lanes 0..A-1: probs, lane A: critic value, lanes > A: exactly 0.
    out = jnp.where(lane == action_space, z, probs)
    # Narrow store: only the useful lanes go back to HBM.
    out_ref[...] = out[:, :out_lanes]


def pack_params(params, input_layer, action_space):
    """Pack per-layer actor/critic weights into one weight slab + one bias slab."""
    A = action_space
    assert A + 1 <= 128, "action_space must be <= 127 for the fused-lane layout"
    in_pad = _round_up(input_layer, 8)
    rows = in_pad + 256

    w = jnp.zeros((rows, 128), jnp.float32)
    # Layer 1: [in, 64] actor || [in, 64] critic
    w = w.at[0:input_layer, 0:64].set(params["aw1"])
    w = w.at[0:input_layer, 64:128].set(params["cw1"])
    # Layer 2 (block-diagonal): actor [64,32] -> cols 0..31, critic [64,32] -> cols 32..63
    w = w.at[in_pad:in_pad + 64, 0:32].set(params["aw2"])
    w = w.at[in_pad + 64:in_pad + 128, 32:64].set(params["cw2"])
    # Layer 3 (block-diagonal): actor [32,A] -> cols 0..A-1, critic [32,1] -> col A
    w = w.at[in_pad + 128:in_pad + 160, 0:A].set(params["aw3"])
    w = w.at[in_pad + 160:in_pad + 192, A:A + 1].set(params["cw3"])

    b = jnp.zeros((8, 128), jnp.float32)
    b = b.at[0, 0:64].set(params["ab1"][0])
    b = b.at[0, 64:128].set(params["cb1"][0])
    b = b.at[1, 0:32].set(params["ab2"][0])
    b = b.at[1, 32:64].set(params["cb2"][0])
    b = b.at[2, 0:A].set(params["ab3"][0])
    b = b.at[2, A].set(params["cb3"][0, 0])
    return w, b


_TB_MAX = 2048  # rows per tile at large batch (step overhead amortization)


def _choose_tiling(B, in_pad):
    """Pick (tile_rows, padded_batch) so that:
      * >= 2 tiles whenever B >= 16 rows (v7x has 2 TensorCores),
      * tiles are large (up to 2048 rows) to amortize per-step overhead,
      * the double-buffered input tile stays ~<= 16 MiB of VMEM,
      * padding beyond B is < ~9 rows per tile (no full-tile dead work)."""
    B8 = max(8, _round_up(B, 8))
    tb_cap = max(64, min(_TB_MAX, ((16 << 20) // (8 * in_pad)) // 8 * 8))
    if B8 <= 8:
        return 8, 8                      # one 8-row tile; cannot split further
    n_tiles = max(2, _cdiv(B8, tb_cap))  # >= 2 tiles for megacore sharding
    tB = _round_up(_cdiv(B8, n_tiles), 8)
    return tB, n_tiles * tB


def actor_critic_forward(x, w_slab, b_slab, action_space):
    """x: [B, input_layer] f32. Returns (actor_probs [B,A], critic_value [B,1])."""
    B, input_layer = x.shape
    in_pad = w_slab.shape[0] - 256
    A = action_space
    out_lanes = _round_up(A + 1, 8)      # packed output: A probs + 1 value, lane-padded to 8

    tB, B_pad = _choose_tiling(B, in_pad)

    # Skip the wrapper-side pad (a full HBM round trip) when shapes already align.
    if B_pad != B or in_pad != input_layer:
        x_in = jnp.pad(x.astype(jnp.float32),
                       ((0, B_pad - B), (0, in_pad - input_layer)))
    else:
        x_in = x

    kernel = functools.partial(_actor_critic_kernel, in_pad=in_pad,
                               action_space=A, out_lanes=out_lanes)

    out = pl.pallas_call(
        kernel,
        out_shape=jax.ShapeDtypeStruct((B_pad, out_lanes), jnp.float32),
        grid=(B_pad // tB,),
        in_specs=[
            pl.BlockSpec((tB, in_pad), lambda i: (i, 0)),        # batch-tiled input
            pl.BlockSpec(w_slab.shape, lambda i: (0, 0)),        # resident weight slab
            pl.BlockSpec(b_slab.shape, lambda i: (0, 0)),        # resident bias slab
        ],
        out_specs=pl.BlockSpec((tB, out_lanes), lambda i: (i, 0)),  # narrow output
        compiler_params=pltpu.CompilerParams(
            dimension_semantics=("parallel",)),
    )(x_in, w_slab, b_slab)

    actor = out[:B, :A]
    critic = out[:B, A:A + 1]
    return actor, critic


def init_params(key, input_layer, action_space):
    """Deterministic init matching PyTorch nn.Linear shapes.

    PyTorch Linear(in, out) has weight [out, in]; we store the transpose
    [in, out] so the kernel does x @ W with no in-kernel transpose.
    Biases are stored as [1, out].
    """
    dims_actor = [(input_layer, 64), (64, 32), (32, action_space)]
    dims_critic = [(input_layer, 64), (64, 32), (32, 1)]
    params = {}
    keys = jax.random.split(key, 12)
    ki = 0
    for name, dims in (("a", dims_actor), ("c", dims_critic)):
        for layer_idx, (fan_in, fan_out) in enumerate(dims, start=1):
            bound = 1.0 / jnp.sqrt(jnp.float32(fan_in))
            w = jax.random.uniform(
                keys[ki], (fan_in, fan_out), jnp.float32, minval=-bound, maxval=bound
            )
            ki += 1
            b = jax.random.uniform(
                keys[ki], (1, fan_out), jnp.float32, minval=-bound, maxval=bound
            )
            ki += 1
            params[f"{name}w{layer_idx}"] = w
            params[f"{name}b{layer_idx}"] = b
    return params


def _reference_forward(x, p):
    """Pure-JAX reference (unfused, unpacked) for correctness checking."""
    h = jnp.tanh(x @ p["aw1"] + p["ab1"])
    h = jnp.tanh(h @ p["aw2"] + p["ab2"])
    logits = h @ p["aw3"] + p["ab3"]
    actor = jax.nn.softmax(logits, axis=-1)
    g = jnp.tanh(x @ p["cw1"] + p["cb1"])
    g = jnp.tanh(g @ p["cw2"] + p["cb2"])
    critic = g @ p["cw3"] + p["cb3"]
    return actor, critic


# TODO(synk): PPO update() (GAE loop, clipped surrogate loss, Adam step) and
# Categorical sampling are host-side training code, not part of the module's
# forward pass, and are intentionally not implemented as Pallas kernels.

if __name__ == "__main__":
    input_layer = 32     # observation size
    action_space = 4     # number of discrete actions

    key = jax.random.PRNGKey(0)
    k_params, k_x1, k_x2 = jax.random.split(key, 3)
    params = init_params(k_params, input_layer, action_space)
    w_slab, b_slab = pack_params(params, input_layer, action_space)

    # Case 1: small aligned batch -> no wrapper padding, single 8-row tile.
    x_small = jax.random.normal(k_x1, (8, input_layer), dtype=jnp.float32)
    a_s, c_s = actor_critic_forward(x_small, w_slab, b_slab, action_space)
    a_s = jax.block_until_ready(a_s)
    c_s = jax.block_until_ready(c_s)
    ra_s, rc_s = _reference_forward(x_small, params)
    assert a_s.shape == (8, action_space)
    assert c_s.shape == (8, 1)
    assert jnp.allclose(a_s, ra_s, atol=1e-5, rtol=1e-5)
    assert jnp.allclose(c_s, rc_s, atol=1e-5, rtol=1e-5)
    assert jnp.allclose(jnp.sum(a_s, axis=-1), 1.0, atol=1e-5)

    # Case 2: ragged batch -> exercises the >=2-tile (megacore) path + tail pad.
    x_rag = jax.random.normal(k_x2, (50, input_layer), dtype=jnp.float32)
    a_r, c_r = actor_critic_forward(x_rag, w_slab, b_slab, action_space)
    a_r = jax.block_until_ready(a_r)
    c_r = jax.block_until_ready(c_r)
    ra_r, rc_r = _reference_forward(x_rag, params)
    assert a_r.shape == (50, action_space)
    assert c_r.shape == (50, 1)
    assert jnp.allclose(a_r, ra_r, atol=1e-5, rtol=1e-5)
    assert jnp.allclose(c_r, rc_r, atol=1e-5, rtol=1e-5)
    assert jnp.allclose(jnp.sum(a_r, axis=-1), 1.0, atol=1e-5)

    print("KERNEL_OK")
</pallas_src>

<mosaic_0001>
module attributes {stable_mosaic.version = 11 : i64} {
  func.func @_actor_critic_kernel(%arg0: i32, %arg1: memref<8x32xf32, #tpu.memory_space<vmem>>, %arg2: memref<288x128xf32, #tpu.memory_space<vmem>>, %arg3: memref<8x128xf32, #tpu.memory_space<vmem>>, %arg4: memref<8x8xf32, #tpu.memory_space<vmem>>) attributes {dimension_semantics = [#tpu.dimension_semantics<parallel>], iteration_bounds = array<i64: 1>, scalar_prefetch = 0 : i64, scratch_operands = 0 : i64, tpu.core_type = #tpu.core_type<tc>, window_params = [{transform_indices = @transform_0, window_bounds = array<i64: 8, 32>}, {pipeline_mode = #tpu.pipeline_mode<synchronous>, transform_indices = @transform_1, window_bounds = array<i64: 288, 128>}, {pipeline_mode = #tpu.pipeline_mode<synchronous>, transform_indices = @transform_2, window_bounds = array<i64: 8, 128>}, {transform_indices = @transform_3, window_bounds = array<i64: 8, 8>}]} {
    %c0 = arith.constant 0 : index
    %c0_0 = arith.constant 0 : index
    %0 = vector.load %arg1[%c0, %c0_0] : memref<8x32xf32, #tpu.memory_space<vmem>>, vector<8x32xf32>
    %c0_1 = arith.constant 0 : index
    %c0_2 = arith.constant 0 : index
    %1 = vector.load %arg3[%c0_1, %c0_2] : memref<8x128xf32, #tpu.memory_space<vmem>>, vector<8x128xf32>
    %c0_3 = arith.constant 0 : index
    %c0_4 = arith.constant 0 : index
    %2 = vector.load %arg2[%c0_3, %c0_4] : memref<288x128xf32, #tpu.memory_space<vmem>>, vector<32x128xf32>
    %c32 = arith.constant 32 : index
    %c0_5 = arith.constant 0 : index
    %3 = vector.load %arg2[%c32, %c0_5] : memref<288x128xf32, #tpu.memory_space<vmem>>, vector<128x128xf32>
    %c160 = arith.constant 160 : index
    %c0_6 = arith.constant 0 : index
    %4 = vector.load %arg2[%c160, %c0_6] : memref<288x128xf32, #tpu.memory_space<vmem>>, vector<128x128xf32>
    %cst = arith.constant dense<0.000000e+00> : vector<8x128xf32>
    %5 = tpu.matmul %0, %2, %cst {dimension_numbers = #tpu.dot_dimension_numbers<[1], [0], [0], [1], [0, 0, 1, 1], [], []>} : vector<8x32xf32>, vector<32x128xf32>, vector<8x128xf32> -> vector<8x128xf32>
    %6 = vector.extract_strided_slice %1 {offsets = [0, 0], sizes = [1, 128], strides = [1, 1]} : vector<8x128xf32> to vector<1x128xf32>
    %7 = vector.broadcast %6 : vector<1x128xf32> to vector<8x128xf32>
    %8 = arith.addf %5, %7 : vector<8x128xf32>
    %9 = math.tanh %8 : vector<8x128xf32>
    %cst_7 = arith.constant dense<0.000000e+00> : vector<8x128xf32>
    %10 = tpu.matmul %9, %3, %cst_7 {dimension_numbers = #tpu.dot_dimension_numbers<[1], [0], [0], [1], [0, 0, 1, 1], [], []>} : vector<8x128xf32>, vector<128x128xf32>, vector<8x128xf32> -> vector<8x128xf32>
    %11 = vector.extract_strided_slice %1 {offsets = [1, 0], sizes = [1, 128], strides = [1, 1]} : vector<8x128xf32> to vector<1x128xf32>
    %12 = vector.broadcast %11 : vector<1x128xf32> to vector<8x128xf32>
    %13 = arith.addf %10, %12 : vector<8x128xf32>
    %14 = math.tanh %13 : vector<8x128xf32>
    %cst_8 = arith.constant dense<0.000000e+00> : vector<8x128xf32>
    %15 = tpu.matmul %14, %4, %cst_8 {dimension_numbers = #tpu.dot_dimension_numbers<[1], [0], [0], [1], [0, 0, 1, 1], [], []>} : vector<8x128xf32>, vector<128x128xf32>, vector<8x128xf32> -> vector<8x128xf32>
    %16 = vector.extract_strided_slice %1 {offsets = [2, 0], sizes = [1, 128], strides = [1, 1]} : vector<8x128xf32> to vector<1x128xf32>
    %17 = vector.broadcast %16 : vector<1x128xf32> to vector<8x128xf32>
    %18 = arith.addf %15, %17 : vector<8x128xf32>
    %19 = tpu.iota {dimensions = array<i32: 1>} : vector<8x128xi32>
    %c4_i32 = arith.constant 4 : i32
    %20 = vector.broadcast %c4_i32 : i32 to vector<8x128xi32>
    %21 = arith.cmpi slt, %19, %20 : vector<8x128xi32>
    %cst_9 = arith.constant 0xFF800000 : f32
    %22 = vector.broadcast %cst_9 : f32 to vector<8x128xf32>
    %23 = arith.select %21, %18, %22 : vector<8x128xi1>, vector<8x128xf32>
    %cst_10 = arith.constant dense<0xFF800000> : vector<8xf32>
    %24 = vector.multi_reduction <maximumf>, %23, %cst_10 [1] : vector<8x128xf32> to vector<8xf32>
    %25 = vector.shape_cast %24 : vector<8xf32> to vector<8x1xf32>
    %26 = vector.broadcast %25 : vector<8x1xf32> to vector<8x128xf32>
    %27 = arith.subf %23, %26 : vector<8x128xf32>
    %28 = math.exp %27 : vector<8x128xf32>
    %cst_11 = arith.constant dense<0.000000e+00> : vector<8xf32>
    %29 = vector.multi_reduction <add>, %28, %cst_11 [1] : vector<8x128xf32> to vector<8xf32>
    %30 = vector.shape_cast %29 : vector<8xf32> to vector<8x1xf32>
    %31 = tpu.reciprocal %30 : vector<8x1xf32> -> vector<8x1xf32>
    %32 = vector.broadcast %31 : vector<8x1xf32> to vector<8x128xf32>
    %33 = arith.mulf %28, %32 : vector<8x128xf32>
    %c4_i32_12 = arith.constant 4 : i32
    %34 = vector.broadcast %c4_i32_12 : i32 to vector<8x128xi32>
    %35 = arith.cmpi eq, %19, %34 : vector<8x128xi32>
    %36 = arith.select %35, %18, %33 : vector<8x128xi1>, vector<8x128xf32>
    %37 = vector.extract_strided_slice %36 {offsets = [0, 0], sizes = [8, 8], strides = [1, 1]} : vector<8x128xf32> to vector<8x8xf32>
    %c0_13 = arith.constant 0 : index
    %c0_14 = arith.constant 0 : index
    %38 = vector.load %arg4[%c0_13, %c0_14] : memref<8x8xf32, #tpu.memory_space<vmem>>, vector<8x8xf32>
    tpu.vector_store %arg4[%c0_13, %c0_14], %37 {strides = array<i32>} : memref<8x8xf32, #tpu.memory_space<vmem>>, vector<8x8xf32>,
    return
  }
  func.func @transform_0(%arg0: i32) -> (i32, i32) {
    %c0_i32 = arith.constant 0 : i32
    %c0_i32_0 = arith.constant 0 : i32
    return %arg0, %c0_i32 : i32, i32
  }
  func.func @transform_1(%arg0: i32) -> (i32, i32) {
    %c0_i32 = arith.constant 0 : i32
    %c0_i32_0 = arith.constant 0 : i32
    %c0_i32_1 = arith.constant 0 : i32
    return %c0_i32, %c0_i32_0 : i32, i32
  }
  func.func @transform_2(%arg0: i32) -> (i32, i32) {
    %c0_i32 = arith.constant 0 : i32
    %c0_i32_0 = arith.constant 0 : i32
    %c0_i32_1 = arith.constant 0 : i32
    return %c0_i32, %c0_i32_0 : i32, i32
  }
  func.func @transform_3(%arg0: i32) -> (i32, i32) {
    %c0_i32 = arith.constant 0 : i32
    %c0_i32_0 = arith.constant 0 : i32
    return %arg0, %c0_i32 : i32, i32
  }
}

</mosaic_0001>

<llo_original>
// kernel: tpu_custom_call.1
$region0: #{tpu_custom_call.1}
  #allocation0 [shape = 'u32[]', space=smem, size = 0x4, offset = 0x4, fixed_abs, tag = 'smem constant byte address 0x4 - core index']
  #allocation1 [shape = 'u32[144,128]{1,0:T(1,128)}', space=vmem, size = 0x12000, scoped, tag = 'internal scratch']
  %s0 = inlined_call_operand.hbm [shape: f32[8,32], index: 0, kind: input, shape index: {}]
  %s1 = inlined_call_operand.hbm [shape: f32[288,128], index: 1, kind: input, shape index: {}]
  %s2 = inlined_call_operand.hbm [shape: f32[8,128], index: 2, kind: input, shape index: {}]
  %s3 = inlined_call_operand.hbm [shape: f32[8,8], index: 3, kind: output, shape index: {}]
  %s4 = sld [smem:[#allocation0]]
  $region34: #{tpu_custom_call.1} parent=0
    _
  %s6 = ssub.s32 1, %s4
  %s7 = scalar_select 0, %s6, %s4
  $region1: #{tpu_custom_call.1} parent=0
    #allocation2 [shape = 'u8[4096]{0}', space=vmem, size = 0x1000, scoped, tag = 'input window, operand 0, single buffered']
    #allocation3 [shape = 's32[1]{0}', space=sflag, size = 0x4, scoped, tag = 'scoped memory for tpu_custom_call.1']
    #allocation4 [shape = 's32[1]{0}', space=sflag, size = 0x4, scoped, tag = 'scoped memory for tpu_custom_call.1']
    #allocation5 [shape = 'u8[147456]{0}', space=vmem, size = 0x24000, scoped, tag = 'input window, operand 1, single buffered']
    #allocation6 [shape = 's32[1]{0}', space=sflag, size = 0x4, scoped, tag = 'scoped memory for tpu_custom_call.1']
    #allocation7 [shape = 'u8[4096]{0}', space=vmem, size = 0x1000, scoped, tag = 'input window, operand 2, single buffered']
    #allocation8 [shape = 'u8[4096]{0}', space=vmem, size = 0x1000, scoped, tag = 'output window, operand 0, single buffered']
    %8 = vsyncpa [#allocation3], 0
    %9 = vsyncpa [#allocation6], 0
    %10 = vsyncpa [#allocation4], 0
    // Predicated region
    $region2: #{tpu_custom_call.1} parent=1 // pred_check
      _
    $region3: #{tpu_custom_call.1} parent=1 // pred_check_branch
      %12 = sbr.rel (0) target = $region5
    $region4: #{tpu_custom_call.1} parent=1 // pred_region
      %s14 = ssub.s32 128, 128
      %15 = vsyncadd [#allocation3], %s14
      %s17 = sshll.u32 [#allocation2], 4
      %s18 = int_to_ptr.vmem [resolvable:$true] %s17
      %20 = dma.hbm_to_vmem [thread:$0]  %s0, 128, %s18, [#allocation3]
    $region5: #{tpu_custom_call.1} parent=1 // pred_fallthru
      _
    // Predicated region
    $region6: #{tpu_custom_call.1} parent=1 // pred_check
      _
    $region7: #{tpu_custom_call.1} parent=1 // pred_check_branch
      %22 = sbr.rel (0) target = $region9
    $region8: #{tpu_custom_call.1} parent=1 // pred_region
      %s24 = ssub.s32 4608, 4608
      %25 = vsyncadd [#allocation6], %s24
      %s26 = sshll.u32 [#allocation5], 4
      %s27 = int_to_ptr.vmem [resolvable:$true] %s26
      %32 = dma.hbm_to_vmem [thread:$0]  %s1, 4608, %s27, [#allocation6], 128, 128, 8
    $region9: #{tpu_custom_call.1} parent=1 // pred_fallthru
      _
    // Predicated region
    $region10: #{tpu_custom_call.1} parent=1 // pred_check
      _
    $region11: #{tpu_custom_call.1} parent=1 // pred_check_branch
      %34 = sbr.rel (0) target = $region13
    $region12: #{tpu_custom_call.1} parent=1 // pred_region
      %s36 = ssub.s32 128, 128
      %37 = vsyncadd [#allocation6], %s36
      %s39 = sshll.u32 [#allocation7], 4
      %s40 = int_to_ptr.vmem [resolvable:$true] %s39
      %42 = dma.hbm_to_vmem [thread:$0]  %s2, 128, %s40, [#allocation6]
    $region13: #{tpu_custom_call.1} parent=1 // pred_fallthru
      _
    // Predicated region
    $region14: #{tpu_custom_call.1} parent=1 // pred_check
      _
    $region15: #{tpu_custom_call.1} parent=1 // pred_check_branch
      %44 = sbr.rel (0) target = $region17
    $region16: #{tpu_custom_call.1} parent=1 // pred_region
      %45 = dma.done [#allocation3], 128
    $region17: #{tpu_custom_call.1} parent=1 // pred_fallthru
      _
    // Predicated region
    $region18: #{tpu_custom_call.1} parent=1 // pred_check
      _
    $region19: #{tpu_custom_call.1} parent=1 // pred_check_branch
      %47 = sbr.rel (0) target = $region21
    $region20: #{tpu_custom_call.1} parent=1 // pred_region
      %48 = dma.done [#allocation6], 4608
    $region21: #{tpu_custom_call.1} parent=1 // pred_fallthru
      _
    // Predicated region
    $region22: #{tpu_custom_call.1} parent=1 // pred_check
      _
    $region23: #{tpu_custom_call.1} parent=1 // pred_check_branch
      %50 = sbr.rel (0) target = $region25
    $region24: #{tpu_custom_call.1} parent=1 // pred_region
      %51 = dma.done [#allocation6], 128
    $region25: #{tpu_custom_call.1} parent=1 // pred_fallthru
      _
    %v52 = vld [vmem:[#allocation2] sm:$0xff]
    %v53 = vld [vmem:[#allocation7] sm:$0xff]
    %v54 = vld [vmem:[#allocation5] sm:$0xff]
    %v55 = vld [vmem:[#allocation5 + $0x8] sm:$0xff]
    %v56 = vld [vmem:[#allocation5 + $0x10] sm:$0xff]
    %v57 = vld [vmem:[#allocation5 + $0x18] sm:$0xff]
    %v58 = vld [vmem:[#allocation5 + $0x20] sm:$0xff]
    %v59 = vld [vmem:[#allocation5 + $0x28] sm:$0xff]
    %v60 = vld [vmem:[#allocation5 + $0x30] sm:$0xff]
    %v61 = vld [vmem:[#allocation5 + $0x38] sm:$0xff]
    %v62 = vld [vmem:[#allocation5 + $0x40] sm:$0xff]
    %v63 = vld [vmem:[#allocation5 + $0x48] sm:$0xff]
    %v64 = vld [vmem:[#allocation5 + $0x50] sm:$0xff]
    %v65 = vld [vmem:[#allocation5 + $0x58] sm:$0xff]
    %v66 = vld [vmem:[#allocation5 + $0x60] sm:$0xff]
    %v67 = vld [vmem:[#allocation5 + $0x68] sm:$0xff]
    %v68 = vld [vmem:[#allocation5 + $0x70] sm:$0xff]
    %v69 = vld [vmem:[#allocation5 + $0x78] sm:$0xff]
    %v70 = vld [vmem:[#allocation5 + $0x80] sm:$0xff]
    %v71 = vld [vmem:[#allocation5 + $0x88] sm:$0xff]
    %v72 = vld [vmem:[#allocation5 + $0x90] sm:$0xff]
    %v73 = vld [vmem:[#allocation5 + $0x98] sm:$0xff]
    %v74 = vld [vmem:[#allocation5 + $0xa0] sm:$0xff]
    %v75 = vld [vmem:[#allocation5 + $0xa8] sm:$0xff]
    %v76 = vld [vmem:[#allocation5 + $0xb0] sm:$0xff]
    %v77 = vld [vmem:[#allocation5 + $0xb8] sm:$0xff]
    %v78 = vld [vmem:[#allocation5 + $0xc0] sm:$0xff]
    %v79 = vld [vmem:[#allocation5 + $0xc8] sm:$0xff]
    %v80 = vld [vmem:[#allocation5 + $0xd0] sm:$0xff]
    %v81 = vld [vmem:[#allocation5 + $0xd8] sm:$0xff]
    %v82 = vld [vmem:[#allocation5 + $0xe0] sm:$0xff]
    %v83 = vld [vmem:[#allocation5 + $0xe8] sm:$0xff]
    %v84 = vld [vmem:[#allocation5 + $0xf0] sm:$0xff]
    %v85 = vld [vmem:[#allocation5 + $0xf8] sm:$0xff]
    %v86 = vld [vmem:[#allocation5 + $0x100] sm:$0xff]
    %v87 = vld [vmem:[#allocation5 + $0x108] sm:$0xff]
    %v88 = vld [vmem:[#allocation5 + $0x110] sm:$0xff]
    %v89 = vld [vmem:[#allocation5 + $0x118] sm:$0xff]
    %v90 = vlaneseq
    %v91 = vshrl.u32 %v90, 7
    %v92 = vsub.s32 0, %v91
    %v93 = vrot.slane %v53, %v92
    %vm94 = vcmask 261120
    %v96 = vsel %vm94, %v52, 0
    %98 = vmatprep.subr.mxu0 0.0
    %99 = vmatpush1.msra.mxu0 %v54
    %100 = vmatprep.subr.mxu0 0.0
    %101 = vmatpush1.msra.mxu0 %v55
    %102 = vmatprep.subr.mxu0 0.0
    %103 = vmatpush1.msra.mxu0 %v56
    %104 = vmatprep.subr.mxu0 0.0
    %105 = vmatpush1.msra.mxu0 %v57
    %106 = vmatprep.subr.mxu0 0.0
    %107 = vmatpush1.msra.mxu0 0.0
    %108 = vmatprep.subr.mxu0 0.0
    %109 = vmatpush1.msra.mxu0 0.0
    %110 = vmatprep.subr.mxu0 0.0
    %111 = vmatpush1.msra.mxu0 0.0
    %112 = vmatprep.subr.mxu0 0.0
    %113 = vmatpush1.msra.mxu0 0.0
    %114 = vmatprep.subr.mxu0 0.0
    %115 = vmatpush1.msra.mxu0 0.0
    %116 = vmatprep.subr.mxu0 0.0
    %117 = vmatpush1.msra.mxu0 0.0
    %118 = vmatprep.subr.mxu0 0.0
    %119 = vmatpush1.msra.mxu0 0.0
    %120 = vmatprep.subr.mxu0 0.0
    %121 = vmatpush1.msra.mxu0 0.0
    %122 = vmatprep.subr.mxu0 0.0
    %123 = vmatpush1.msra.mxu0 0.0
    %124 = vmatprep.subr.mxu0 0.0
    %125 = vmatpush1.msra.mxu0 0.0
    %126 = vmatprep.subr.mxu0 0.0
    %127 = vmatpush1.msra.mxu0 0.0
    %128 = vmatprep.subr.mxu0 0.0
    %129 = vmatpush1.msra.mxu0 0.0
    %130 = vmatprep.subr.mxu0 0.0
    %131 = vmatpush1.msra.mxu0 0.0
    %132 = vmatprep.subr.mxu0 0.0
    %133 = vmatpush1.msra.mxu0 0.0
    %134 = vmatprep.subr.mxu0 0.0
    %135 = vmatpush1.msra.mxu0 0.0
    %136 = vmatprep.subr.mxu0 0.0
    %137 = vmatpush1.msra.mxu0 0.0
    %138 = vmatprep.subr.mxu0 0.0
    %139 = vmatpush1.msra.mxu0 0.0
    %140 = vmatprep.subr.mxu0 0.0
    %141 = vmatpush1.msra.mxu0 0.0
    %142 = vmatprep.subr.mxu0 0.0
    %143 = vmatpush1.msra.mxu0 0.0
    %144 = vmatprep.subr.mxu0 0.0
    %145 = vmatpush1.msra.mxu0 0.0
    %146 = vmatprep.subr.mxu0 0.0
    %147 = vmatpush1.msra.mxu0 0.0
    %148 = vmatprep.subr.mxu0 0.0
    %149 = vmatpush1.msra.mxu0 0.0
    %150 = vmatprep.subr.mxu0 0.0
    %151 = vmatpush1.msra.mxu0 0.0
    %152 = vmatprep.subr.mxu0 0.0
    %153 = vmatpush1.msra.mxu0 0.0
    %154 = vmatprep.subr.mxu0 0.0
    %155 = vmatpush1.msra.mxu0 0.0
    %156 = vmatprep.subr.mxu0 0.0
    %157 = vmatpush1.msra.mxu0 0.0
    %158 = vmatprep.subr.mxu0 0.0
    %159 = vmatpush1.msra.mxu0 0.0
    %160 = vmatprep.subr.mxu0 0.0
    %161 = vmatpush1.msra.mxu0 0.0
    %162 = vmatprep.mubr.f32.mxu0 0.0
    %163 = vmatmul.mubr.f32.gmra.mrb[0].mxu0 %v96
    %v164 = vpop.f32.mrb[0].mxu0
    %v165 = vadd.f32 %v93, %v164
    %v166 = vpop.f32.mrb[0].mxu0
    %167 = vdwg.mxu0
    %v168 = vtanh.pop %v165
    %v169 = vlaneseq
    %v170 = vshrl.u32 %v169, 7
    %v171 = vsub.s32 1, %v170
    %v172 = vrot.slane %v53, %v171
    %173 = vmatprep.subr.mxu0 0.0
    %174 = vmatpush1.msra.mxu0 %v58
    %175 = vmatprep.subr.mxu0 0.0
    %176 = vmatpush1.msra.mxu0 %v59
    %177 = vmatprep.subr.mxu0 0.0
    %178 = vmatpush1.msra.mxu0 %v60
    %179 = vmatprep.subr.mxu0 0.0
    %180 = vmatpush1.msra.mxu0 %v61
    %181 = vmatprep.subr.mxu0 0.0
    %182 = vmatpush1.msra.mxu0 %v62
    %183 = vmatprep.subr.mxu0 0.0
    %184 = vmatpush1.msra.mxu0 %v63
    %185 = vmatprep.subr.mxu0 0.0
    %186 = vmatpush1.msra.mxu0 %v64
    %187 = vmatprep.subr.mxu0 0.0
    %188 = vmatpush1.msra.mxu0 %v65
    %189 = vmatprep.subr.mxu0 0.0
    %190 = vmatpush1.msra.mxu0 %v66
    %191 = vmatprep.subr.mxu0 0.0
    %192 = vmatpush1.msra.mxu0 %v67
    %193 = vmatprep.subr.mxu0 0.0
    %194 = vmatpush1.msra.mxu0 %v68
    %195 = vmatprep.subr.mxu0 0.0
    %196 = vmatpush1.msra.mxu0 %v69
    %197 = vmatprep.subr.mxu0 0.0
    %198 = vmatpush1.msra.mxu0 %v70
    %199 = vmatprep.subr.mxu0 0.0
    %200 = vmatpush1.msra.mxu0 %v71
    %201 = vmatprep.subr.mxu0 0.0
    %202 = vmatpush1.msra.mxu0 %v72
    %203 = vmatprep.subr.mxu0 0.0
    %204 = vmatpush1.msra.mxu0 %v73
    %205 = vmatprep.subr.mxu0 0.0
    %206 = vmatpush1.msra.mxu0 0.0
    %207 = vmatprep.subr.mxu0 0.0
    %208 = vmatpush1.msra.mxu0 0.0
    %209 = vmatprep.subr.mxu0 0.0
    %210 = vmatpush1.msra.mxu0 0.0
    %211 = vmatprep.subr.mxu0 0.0
    %212 = vmatpush1.msra.mxu0 0.0
    %213 = vmatprep.subr.mxu0 0.0
    %214 = vmatpush1.msra.mxu0 0.0
    %215 = vmatprep.subr.mxu0 0.0
    %216 = vmatpush1.msra.mxu0 0.0
    %217 = vmatprep.subr.mxu0 0.0
    %218 = vmatpush1.msra.mxu0 0.0
    %219 = vmatprep.subr.mxu0 0.0
    %220 = vmatpush1.msra.mxu0 0.0
    %221 = vmatprep.subr.mxu0 0.0
    %222 = vmatpush1.msra.mxu0 0.0
    %223 = vmatprep.subr.mxu0 0.0
    %224 = vmatpush1.msra.mxu0 0.0
    %225 = vmatprep.subr.mxu0 0.0
    %226 = vmatpush1.msra.mxu0 0.0
    %227 = vmatprep.subr.mxu0 0.0
    %228 = vmatpush1.msra.mxu0 0.0
    %229 = vmatprep.subr.mxu0 0.0
    %230 = vmatpush1.msra.mxu0 0.0
    %231 = vmatprep.subr.mxu0 0.0
    %232 = vmatpush1.msra.mxu0 0.0
    %233 = vmatprep.subr.mxu0 0.0
    %234 = vmatpush1.msra.mxu0 0.0
    %235 = vmatprep.subr.mxu0 0.0
    %236 = vmatpush1.msra.mxu0 0.0
    %237 = vmatprep.mubr.f32.mxu0 0.0
    %238 = vmatmul.mubr.f32.gmra.mrb[0].mxu0 %v168
    %v239 = vpop.f32.mrb[0].mxu0
    %v240 = vadd.f32 %v172, %v239
    %v241 = vpop.f32.mrb[0].mxu0
    %242 = vdwg.mxu0
    %v243 = vtanh.pop %v240
    %v244 = vlaneseq
    %v245 = vshrl.u32 %v244, 7
    %v246 = vsub.s32 2, %v245
    %v247 = vrot.slane %v53, %v246
    %248 = vmatprep.subr.mxu0 0.0
    %249 = vmatpush1.msra.mxu0 %v74
    %250 = vmatprep.subr.mxu0 0.0
    %251 = vmatpush1.msra.mxu0 %v75
    %252 = vmatprep.subr.mxu0 0.0
    %253 = vmatpush1.msra.mxu0 %v76
    %254 = vmatprep.subr.mxu0 0.0
    %255 = vmatpush1.msra.mxu0 %v77
    %256 = vmatprep.subr.mxu0 0.0
    %257 = vmatpush1.msra.mxu0 %v78
    %258 = vmatprep.subr.mxu0 0.0
    %259 = vmatpush1.msra.mxu0 %v79
    %260 = vmatprep.subr.mxu0 0.0
    %261 = vmatpush1.msra.mxu0 %v80
    %262 = vmatprep.subr.mxu0 0.0
    %263 = vmatpush1.msra.mxu0 %v81
    %264 = vmatprep.subr.mxu0 0.0
    %265 = vmatpush1.msra.mxu0 %v82
    %266 = vmatprep.subr.mxu0 0.0
    %267 = vmatpush1.msra.mxu0 %v83
    %268 = vmatprep.subr.mxu0 0.0
    %269 = vmatpush1.msra.mxu0 %v84
    %270 = vmatprep.subr.mxu0 0.0
    %271 = vmatpush1.msra.mxu0 %v85
    %272 = vmatprep.subr.mxu0 0.0
    %273 = vmatpush1.msra.mxu0 %v86
    %274 = vmatprep.subr.mxu0 0.0
    %275 = vmatpush1.msra.mxu0 %v87
    %276 = vmatprep.subr.mxu0 0.0
    %277 = vmatpush1.msra.mxu0 %v88
    %278 = vmatprep.subr.mxu0 0.0
    %279 = vmatpush1.msra.mxu0 %v89
    %280 = vmatprep.subr.mxu0 0.0
    %281 = vmatpush1.msra.mxu0 0.0
    %282 = vmatprep.subr.mxu0 0.0
    %283 = vmatpush1.msra.mxu0 0.0
    %284 = vmatprep.subr.mxu0 0.0
    %285 = vmatpush1.msra.mxu0 0.0
    %286 = vmatprep.subr.mxu0 0.0
    %287 = vmatpush1.msra.mxu0 0.0
    %288 = vmatprep.subr.mxu0 0.0
    %289 = vmatpush1.msra.mxu0 0.0
    %290 = vmatprep.subr.mxu0 0.0
    %291 = vmatpush1.msra.mxu0 0.0
    %292 = vmatprep.subr.mxu0 0.0
    %293 = vmatpush1.msra.mxu0 0.0
    %294 = vmatprep.subr.mxu0 0.0
    %295 = vmatpush1.msra.mxu0 0.0
    %296 = vmatprep.subr.mxu0 0.0
    %297 = vmatpush1.msra.mxu0 0.0
    %298 = vmatprep.subr.mxu0 0.0
    %299 = vmatpush1.msra.mxu0 0.0
    %300 = vmatprep.subr.mxu0 0.0
    %301 = vmatpush1.msra.mxu0 0.0
    %302 = vmatprep.subr.mxu0 0.0
    %303 = vmatpush1.msra.mxu0 0.0
    %304 = vmatprep.subr.mxu0 0.0
    %305 = vmatpush1.msra.mxu0 0.0
    %306 = vmatprep.subr.mxu0 0.0
    %307 = vmatpush1.msra.mxu0 0.0
    %308 = vmatprep.subr.mxu0 0.0
    %309 = vmatpush1.msra.mxu0 0.0
    %310 = vmatprep.subr.mxu0 0.0
    %311 = vmatpush1.msra.mxu0 0.0
    %312 = vmatprep.mubr.f32.mxu0 0.0
    %313 = vmatmul.mubr.f32.gmra.mrb[0].mxu0 %v243
    %v314 = vpop.f32.mrb[0].mxu0
    %v315 = vadd.f32 %v247, %v314
    %v316 = vpop.f32.mrb[0].mxu0
    %317 = vdwg.mxu0
    %v318 = vlaneseq
    %v319 = vand.u32 %v318, 127
    %vm320 = vcmp.lt.s32.totalorder %v319, 4
    %v321 = vsel %vm320, %v315, -inf
    %322 = vmax.xlane.f32.xlu0 %v321
    %v323 = vpop.xlane.xlu0 %322
    %v324 = vsub.f32 %v321, %v323
    %v325 = vmul.f32 %v324, 1.442695
    %v326 = vpow.pop %v325
    %327 = vadd.xlane.f32.xlu0 %v326
    %v328 = vpop.xlane.xlu0 %327
    %v329 = vrcp.pop %v328
    %v330 = vmul.f32 %v326, %v329
    %vm331 = vcmp.eq.s32.totalorder %v319, 4
    %v332 = vsel %vm331, %v315, %v330
    %vm333 = vcmask 64512
    %334 = vst.msk [vmem:[#allocation8] sm:$0xff] %vm333, %v332
    // Predicated region
    $region26: #{tpu_custom_call.1} parent=1 // pred_check
      _
    $region27: #{tpu_custom_call.1} parent=1 // pred_check_branch
      %336 = sbr.rel (0) target = $region29
    $region28: #{tpu_custom_call.1} parent=1 // pred_region
      %s338 = ssub.s32 128, 128
      %339 = vsyncadd [#allocation4], %s338
      %s341 = sshll.u32 [#allocation8], 4
      %s342 = int_to_ptr.vmem [resolvable:$true] %s341
      %344 = dma.vmem_to_hbm [thread:$0]  %s342, 128, %s3, [#allocation4]
    $region29: #{tpu_custom_call.1} parent=1 // pred_fallthru
      _
    // Predicated region
    $region30: #{tpu_custom_call.1} parent=1 // pred_check
      _
    $region31: #{tpu_custom_call.1} parent=1 // pred_check_branch
      %346 = sbr.rel (0) target = $region33
    $region32: #{tpu_custom_call.1} parent=1 // pred_region
      %347 = dma.done [#allocation4], 128
    $region33: #{tpu_custom_call.1} parent=1 // pred_fallthru
      _
    %348 = vsyncpa [#allocation3], 1
    %349 = vsyncpa [#allocation6], 1
    %350 = vsyncpa [#allocation4], 1

</llo_original>
